<compile_context>
chip_gen: v6e
topology: v6e:2x2x1
jax: 0.10.0
libtpu: 0.0.40
codegen_flags: <defaults>
</compile_context>

<pallas_src>
import functools

import jax
import jax.numpy as jnp
from jax.experimental import pallas as pl
from jax.experimental.pallas import tpu as pltpu


def _round_up(x, m):
    return (x + m - 1) // m * m


def qmixer_kernel(s_ref, q_ref, w_ref, b_ref, exp_ref, v2w_ref, v2b_ref,
                  out_ref, *, n_agents, embed_dim, b1_off, wf_off, v1_off):
    A, E = n_agents, embed_dim
    AE = A * E

    # One fused MXU matmul for all four hyper-net heads (w1 | b1 | wf | v1).
    # Inputs may be bf16 (cast once in the wrapper); accumulation is f32.
    h = jnp.dot(s_ref[...], w_ref[...],
                preferred_element_type=jnp.float32) + b_ref[...]      # [tm, P]

    # Replicate each agent-q across its E lanes with a tiny f32 selector
    # matmul (keeps agent_qs exact in f32, off the bf16 path, no per-agent
    # lane broadcasts on the VPU/XLU).
    q_exp = jnp.dot(q_ref[...], exp_ref[...],
                    preferred_element_type=jnp.float32)               # [tm, A*E]

    w1 = jnp.abs(h[:, 0:AE])                          # [tm, A*E]
    b1 = h[:, b1_off:b1_off + E]                      # [tm, E] (lane-aligned)
    wf = jnp.abs(h[:, wf_off:wf_off + E])             # [tm, E] (small rotate)
    vh = jnp.maximum(h[:, v1_off:v1_off + E], 0.0)    # [tm, E] ReLU layer of V

    prod = w1 * q_exp                                 # q_a * |w1_a|, full lane width

    # Reduce the A groups of E lanes down to one E-wide vector.
    use_roll = (A > 1) and (A & (A - 1) == 0) and (AE % 128 == 0)
    if use_roll:
        # XLU roll tree (log2(A) roll+add steps); direction-independent
        # because after each step the array is periodic with the next shift.
        acc = prod
        shift = AE // 2
        while shift >= E:
            acc = acc + pltpu.roll(acc, shift, axis=1)
            shift //= 2
        qw = acc[:, 0:E]
    else:
        qw = prod[:, 0:E]
        for a in range(1, A):                         # fallback: static slice adds
            qw = qw + prod[:, a * E:(a + 1) * E]

    # ELU (alpha = 1).  exp(min(x,0)) - 1 differs from expm1 by <= ~1.2e-7
    # absolute (1 ulp of 1.0); kept so we only rely on guaranteed EUP exp.
    pre = qw + b1
    hidden = jnp.where(pre > 0.0, pre, jnp.exp(jnp.minimum(pre, 0.0)) - 1.0)

    # q_tot_row = sum_e hidden*wf + (vh @ v2_w + v2_b), emitted lane-dense.
    contrib = hidden * wf + vh * v2w_ref[...]         # [tm, E]
    y = jnp.sum(contrib, axis=-1).reshape(1, -1) + v2b_ref[...]       # [1, tm]
    out_ref[...] = y.reshape(out_ref.shape).astype(out_ref.dtype)


def prepare_qmixer_params(params, *, n_agents, embed_dim,
                          matmul_dtype=jnp.bfloat16):
    """Assemble the fused hyper-net weights ONCE per parameter update."""
    A, E = n_agents, embed_dim
    AE = A * E
    S = params["w1_w"].shape[0]

    # fused column layout: [ w1 (A*E) | pad | b1 (E) | wf (E) | v1 (E) | pad ]
    b1_off = _round_up(AE, 128)          # b1 starts on a fresh 128-lane group
    wf_off = b1_off + E
    v1_off = wf_off + E
    P = _round_up(v1_off + E, 128)

    Ws = jnp.zeros((S, P), jnp.float32)
    Ws = Ws.at[:, 0:AE].set(params["w1_w"])
    Ws = Ws.at[:, b1_off:b1_off + E].set(params["b1_w"])
    Ws = Ws.at[:, wf_off:wf_off + E].set(params["wf_w"])
    Ws = Ws.at[:, v1_off:v1_off + E].set(params["v1_w"])

    bs = jnp.zeros((1, P), jnp.float32)
    bs = bs.at[:, 0:AE].set(params["w1_b"])
    bs = bs.at[:, b1_off:b1_off + E].set(params["b1_b"])
    bs = bs.at[:, wf_off:wf_off + E].set(params["wf_b"])
    bs = bs.at[:, v1_off:v1_off + E].set(params["v1_b"])

    # 0/1 selector replicating q[:, a] across lanes a*E .. (a+1)*E-1 (f32).
    expand = (jnp.arange(A)[:, None] == (jnp.arange(AE) // E)[None, :])

    return {
        "Ws": Ws.astype(matmul_dtype),      # cast once here, not per call
        "bs": bs,                           # biases stay f32 (added post-MXU)
        "expand": expand.astype(jnp.float32),
        "v2w": params["v2_w"].reshape(1, E).astype(jnp.float32),
        "v2b": params["v2_b"].reshape(1, 1).astype(jnp.float32),
        "n_agents": A, "embed_dim": E, "state_dim": S, "P": P,
        "b1_off": b1_off, "wf_off": wf_off, "v1_off": v1_off,
        "matmul_dtype": matmul_dtype,
    }


def qmixer_forward(agent_qs, states, prepared, *, block_rows=4096,
                   vmem_limit_bytes=48 * 1024 * 1024):
    """agent_qs: [B, T, n_agents], states: [B, T, state_dim] -> [B, T, 1].

    block_rows: rows per grid step.  ~2048 on v5e, ~4096 on v6e/v7x.  VMEM use
    at 4096 rows / bf16 states is ~25-30 MiB, inside the explicit
    vmem_limit_bytes and v7x's 64 MiB physical VMEM.
    """
    A = prepared["n_agents"]
    E = prepared["embed_dim"]
    S = prepared["state_dim"]
    P = prepared["P"]
    B, T, _ = agent_qs.shape
    N = B * T
    mdt = prepared["matmul_dtype"]

    # Row streams: no concat, no pad.  states cast to the matmul dtype in the
    # wrapper (halves its HBM stream in bf16); agent_qs stays exact in f32.
    s = states.reshape(N, S).astype(mdt)
    q = agent_qs.reshape(N, A).astype(jnp.float32)

    # Big row tiles amortize the ~0.35us per-step pipeline overhead, but keep
    # >= 2 grid steps when N allows so both v7x TensorCores get work.
    block_rows = max(128, _round_up(min(block_rows, N), 128))
    if N >= 256:
        block_rows = min(block_rows, _round_up(pl.cdiv(N, 2), 128))
    grid_n = pl.cdiv(N, block_rows)
    n_pad = grid_n * block_rows   # ragged last tile: OOB rows read as padding
                                  # and the extra output rows are sliced below.

    kern = functools.partial(
        qmixer_kernel, n_agents=A, embed_dim=E,
        b1_off=prepared["b1_off"], wf_off=prepared["wf_off"],
        v1_off=prepared["v1_off"])

    out = pl.pallas_call(
        kern,
        out_shape=jax.ShapeDtypeStruct((grid_n, 1, block_rows), jnp.float32),
        grid=(grid_n,),
        in_specs=[
            pl.BlockSpec((block_rows, S), lambda i: (i, 0)),   # states rows
            pl.BlockSpec((block_rows, A), lambda i: (i, 0)),   # agent-q rows
            pl.BlockSpec((S, P), lambda i: (0, 0)),            # fused weights
            pl.BlockSpec((1, P), lambda i: (0, 0)),            # fused biases
            pl.BlockSpec((A, A * E), lambda i: (0, 0)),        # q lane selector
            pl.BlockSpec((1, E), lambda i: (0, 0)),            # v2 weight row
            pl.BlockSpec((1, 1), lambda i: (0, 0)),            # v2 bias
        ],
        # lane-dense output: one [1, 1, block_rows] row-vector slab per step
        out_specs=pl.BlockSpec((1, 1, block_rows), lambda i: (i, 0, 0)),
        compiler_params=pltpu.CompilerParams(
            dimension_semantics=("parallel",),
            vmem_limit_bytes=vmem_limit_bytes),
    )(s, q, prepared["Ws"], prepared["bs"], prepared["expand"],
      prepared["v2w"], prepared["v2b"])

    return out.reshape(n_pad)[:N].reshape(B, T, 1)


def init_params(key, state_dim, n_agents, embed_dim):
    """Deterministic synthetic params, stored pre-transposed: [in, out]."""
    ks = jax.random.split(key, 10)
    u = lambda k, shp, bound: jax.random.uniform(
        k, shp, jnp.float32, minval=-bound, maxval=bound)
    b_s = 1.0 / jnp.sqrt(state_dim)
    b_e = 1.0 / jnp.sqrt(embed_dim)
    return {
        "w1_w": u(ks[0], (state_dim, n_agents * embed_dim), b_s),
        "w1_b": u(ks[1], (1, n_agents * embed_dim), b_s),
        "b1_w": u(ks[2], (state_dim, embed_dim), b_s),
        "b1_b": u(ks[3], (1, embed_dim), b_s),
        "wf_w": u(ks[4], (state_dim, embed_dim), b_s),
        "wf_b": u(ks[5], (1, embed_dim), b_s),
        "v1_w": u(ks[6], (state_dim, embed_dim), b_s),
        "v1_b": u(ks[7], (1, embed_dim), b_s),
        "v2_w": u(ks[8], (embed_dim, 1), b_e),
        "v2_b": u(ks[9], (1, 1), b_e),
    }


def qmixer_reference(agent_qs, states, params, *, embed_dim,
                     matmul_dtype=jnp.float32):
    """Pure-JAX reference mirroring the PyTorch forward.

    With matmul_dtype=bf16 it applies the same input/weight quantization as
    the kernel's bf16 path (compute / accumulation stays f32)."""
    B, T, A = agent_qs.shape
    S = states.shape[-1]
    N = B * T
    cast = lambda a: a.astype(matmul_dtype).astype(jnp.float32)
    s = cast(states.reshape(N, S))
    q = agent_qs.reshape(N, 1, A).astype(jnp.float32)
    w1 = jnp.abs(s @ cast(params["w1_w"]) + params["w1_b"]).reshape(N, A, embed_dim)
    b1 = (s @ cast(params["b1_w"]) + params["b1_b"]).reshape(N, 1, embed_dim)
    hidden = jax.nn.elu(jnp.einsum("nia,nae->nie", q, w1) + b1)
    wf = jnp.abs(s @ cast(params["wf_w"]) + params["wf_b"]).reshape(N, embed_dim, 1)
    v = (jnp.maximum(s @ cast(params["v1_w"]) + params["v1_b"], 0.0)
         @ params["v2_w"] + params["v2_b"]).reshape(N, 1, 1)
    y = jnp.einsum("nie,nej->nij", hidden, wf) + v
    return y.reshape(B, T, 1)


if __name__ == "__main__":
    B, T = 2, 64                 # flattened rows N = 128 (single grid step)
    n_agents = 4
    state_dim = 32
    embed_dim = 32

    key = jax.random.PRNGKey(0)
    k_p, k_q, k_s = jax.random.split(key, 3)
    params = init_params(k_p, state_dim, n_agents, embed_dim)

    agent_qs = jax.random.normal(k_q, (B, T, n_agents), jnp.float32)
    states = jax.random.normal(k_s, (B, T, state_dim), jnp.float32)

    # --- exact f32 path: tight check vs the pure-JAX reference --------------
    prep_f32 = prepare_qmixer_params(params, n_agents=n_agents,
                                     embed_dim=embed_dim,
                                     matmul_dtype=jnp.float32)
    q_f32 = jax.block_until_ready(qmixer_forward(agent_qs, states, prep_f32))
    ref_f32 = qmixer_reference(agent_qs, states, params, embed_dim=embed_dim)
    assert q_f32.shape == (B, T, 1)
    assert jnp.allclose(q_f32, ref_f32, atol=1e-3, rtol=1e-3), "f32 mismatch"

    # --- recommended bf16-input path (default): compare against a reference
    # with the same bf16 input/weight quantization (both accumulate in f32) ---
    prep_bf16 = prepare_qmixer_params(params, n_agents=n_agents,
                                      embed_dim=embed_dim)   # bf16 default
    q_bf16 = jax.block_until_ready(qmixer_forward(agent_qs, states, prep_bf16))
    ref_bf16 = qmixer_reference(agent_qs, states, params, embed_dim=embed_dim,
                                matmul_dtype=jnp.bfloat16)
    assert q_bf16.shape == (B, T, 1)
    assert jnp.allclose(q_bf16, ref_bf16, atol=2e-3, rtol=2e-3), "bf16 mismatch"

    print("KERNEL_OK")
</pallas_src>

<mosaic_0001>
module attributes {stable_mosaic.version = 11 : i64} {
  func.func @qmixer_kernel(%arg0: i32, %arg1: memref<128x32xf32, #tpu.memory_space<vmem>>, %arg2: memref<128x4xf32, #tpu.memory_space<vmem>>, %arg3: memref<32x256xf32, #tpu.memory_space<vmem>>, %arg4: memref<1x256xf32, #tpu.memory_space<vmem>>, %arg5: memref<4x128xf32, #tpu.memory_space<vmem>>, %arg6: memref<1x32xf32, #tpu.memory_space<vmem>>, %arg7: memref<1x1xf32, #tpu.memory_space<vmem>>, %arg8: memref<1x1x128xf32, #tpu.memory_space<vmem>>) attributes {dimension_semantics = [#tpu.dimension_semantics<parallel>], iteration_bounds = array<i64: 1>, scalar_prefetch = 0 : i64, scratch_operands = 0 : i64, tpu.core_type = #tpu.core_type<tc>, window_params = [{transform_indices = @transform_0, window_bounds = array<i64: 128, 32>}, {transform_indices = @transform_1, window_bounds = array<i64: 128, 4>}, {pipeline_mode = #tpu.pipeline_mode<synchronous>, transform_indices = @transform_2, window_bounds = array<i64: 32, 256>}, {pipeline_mode = #tpu.pipeline_mode<synchronous>, transform_indices = @transform_3, window_bounds = array<i64: 1, 256>}, {pipeline_mode = #tpu.pipeline_mode<synchronous>, transform_indices = @transform_4, window_bounds = array<i64: 4, 128>}, {pipeline_mode = #tpu.pipeline_mode<synchronous>, transform_indices = @transform_5, window_bounds = array<i64: 1, 32>}, {pipeline_mode = #tpu.pipeline_mode<synchronous>, transform_indices = @transform_6, window_bounds = array<i64: 1, 1>}, {transform_indices = @transform_7, window_bounds = array<i64: 1, 1, 128>}]} {
    %c0 = arith.constant 0 : index
    %c0_0 = arith.constant 0 : index
    %0 = vector.load %arg1[%c0, %c0_0] : memref<128x32xf32, #tpu.memory_space<vmem>>, vector<128x32xf32>
    %c0_1 = arith.constant 0 : index
    %c0_2 = arith.constant 0 : index
    %1 = vector.load %arg3[%c0_1, %c0_2] : memref<32x256xf32, #tpu.memory_space<vmem>>, vector<32x256xf32>
    %cst = arith.constant dense<0.000000e+00> : vector<128x256xf32>
    %2 = tpu.matmul %0, %1, %cst {dimension_numbers = #tpu.dot_dimension_numbers<[1], [0], [0], [1], [0, 0, 1, 1], [], []>} : vector<128x32xf32>, vector<32x256xf32>, vector<128x256xf32> -> vector<128x256xf32>
    %c0_3 = arith.constant 0 : index
    %c0_4 = arith.constant 0 : index
    %3 = vector.load %arg4[%c0_3, %c0_4] : memref<1x256xf32, #tpu.memory_space<vmem>>, vector<1x256xf32>
    %4 = vector.broadcast %3 : vector<1x256xf32> to vector<128x256xf32>
    %5 = arith.addf %2, %4 : vector<128x256xf32>
    %c0_5 = arith.constant 0 : index
    %c0_6 = arith.constant 0 : index
    %6 = vector.load %arg2[%c0_5, %c0_6] : memref<128x4xf32, #tpu.memory_space<vmem>>, vector<128x4xf32>
    %c0_7 = arith.constant 0 : index
    %c0_8 = arith.constant 0 : index
    %7 = vector.load %arg5[%c0_7, %c0_8] : memref<4x128xf32, #tpu.memory_space<vmem>>, vector<4x128xf32>
    %cst_9 = arith.constant dense<0.000000e+00> : vector<128x128xf32>
    %8 = tpu.matmul %6, %7, %cst_9 {dimension_numbers = #tpu.dot_dimension_numbers<[1], [0], [0], [1], [0, 0, 1, 1], [], []>} : vector<128x4xf32>, vector<4x128xf32>, vector<128x128xf32> -> vector<128x128xf32>
    %9 = vector.extract_strided_slice %5 {offsets = [0, 0], sizes = [128, 128], strides = [1, 1]} : vector<128x256xf32> to vector<128x128xf32>
    %10 = math.absf %9 : vector<128x128xf32>
    %11 = vector.extract_strided_slice %5 {offsets = [0, 128], sizes = [128, 32], strides = [1, 1]} : vector<128x256xf32> to vector<128x32xf32>
    %12 = vector.extract_strided_slice %5 {offsets = [0, 160], sizes = [128, 32], strides = [1, 1]} : vector<128x256xf32> to vector<128x32xf32>
    %13 = math.absf %12 : vector<128x32xf32>
    %14 = vector.extract_strided_slice %5 {offsets = [0, 192], sizes = [128, 32], strides = [1, 1]} : vector<128x256xf32> to vector<128x32xf32>
    %cst_10 = arith.constant 0.000000e+00 : f32
    %15 = vector.broadcast %cst_10 : f32 to vector<128x32xf32>
    %16 = arith.maximumf %14, %15 : vector<128x32xf32>
    %17 = arith.mulf %10, %8 : vector<128x128xf32>
    %c64_i32 = arith.constant 64 : i32
    %18 = tpu.dynamic_rotate %17 by %c64_i32 dim 1 : vector<128x128xf32>, i32 -> vector<128x128xf32>
    %19 = arith.addf %17, %18 : vector<128x128xf32>
    %c32_i32 = arith.constant 32 : i32
    %20 = tpu.dynamic_rotate %19 by %c32_i32 dim 1 : vector<128x128xf32>, i32 -> vector<128x128xf32>
    %21 = arith.addf %19, %20 : vector<128x128xf32>
    %22 = vector.extract_strided_slice %21 {offsets = [0, 0], sizes = [128, 32], strides = [1, 1]} : vector<128x128xf32> to vector<128x32xf32>
    %23 = arith.addf %22, %11 : vector<128x32xf32>
    %cst_11 = arith.constant 0.000000e+00 : f32
    %24 = vector.broadcast %cst_11 : f32 to vector<128x32xf32>
    %25 = arith.cmpf ogt, %23, %24 : vector<128x32xf32>
    %cst_12 = arith.constant 0.000000e+00 : f32
    %26 = vector.broadcast %cst_12 : f32 to vector<128x32xf32>
    %27 = arith.minimumf %23, %26 : vector<128x32xf32>
    %28 = math.exp %27 : vector<128x32xf32>
    %cst_13 = arith.constant 1.000000e+00 : f32
    %29 = vector.broadcast %cst_13 : f32 to vector<128x32xf32>
    %30 = arith.subf %28, %29 : vector<128x32xf32>
    %31 = arith.select %25, %23, %30 : vector<128x32xi1>, vector<128x32xf32>
    %32 = arith.mulf %31, %13 : vector<128x32xf32>
    %c0_14 = arith.constant 0 : index
    %c0_15 = arith.constant 0 : index
    %33 = vector.load %arg6[%c0_14, %c0_15] : memref<1x32xf32, #tpu.memory_space<vmem>>, vector<1x32xf32>
    %34 = vector.broadcast %33 : vector<1x32xf32> to vector<128x32xf32>
    %35 = arith.mulf %16, %34 : vector<128x32xf32>
    %36 = arith.addf %32, %35 : vector<128x32xf32>
    %cst_16 = arith.constant dense<0.000000e+00> : vector<128xf32>
    %37 = vector.multi_reduction <add>, %36, %cst_16 [1] : vector<128x32xf32> to vector<128xf32>
    %38 = vector.shape_cast %37 : vector<128xf32> to vector<1x128xf32>
    %c0_17 = arith.constant 0 : index
    %c0_18 = arith.constant 0 : index
    %39 = vector.load %arg7[%c0_17, %c0_18] : memref<1x1xf32, #tpu.memory_space<vmem>>, vector<1x1xf32>
    %40 = vector.broadcast %39 : vector<1x1xf32> to vector<1x128xf32>
    %41 = arith.addf %38, %40 : vector<1x128xf32>
    %42 = vector.shape_cast %41 : vector<1x128xf32> to vector<1x1x128xf32>
    %c0_19 = arith.constant 0 : index
    %c0_20 = arith.constant 0 : index
    %c0_21 = arith.constant 0 : index
    %43 = vector.load %arg8[%c0_19, %c0_20, %c0_21] : memref<1x1x128xf32, #tpu.memory_space<vmem>>, vector<1x1x128xf32>
    tpu.vector_store %arg8[%c0_19, %c0_20, %c0_21], %42 {strides = array<i32>} : memref<1x1x128xf32, #tpu.memory_space<vmem>>, vector<1x1x128xf32>,
    return
  }
  func.func @transform_0(%arg0: i32) -> (i32, i32) {
    %c0_i32 = arith.constant 0 : i32
    %c0_i32_0 = arith.constant 0 : i32
    return %arg0, %c0_i32 : i32, i32
  }
  func.func @transform_1(%arg0: i32) -> (i32, i32) {
    %c0_i32 = arith.constant 0 : i32
    %c0_i32_0 = arith.constant 0 : i32
    return %arg0, %c0_i32 : i32, i32
  }
  func.func @transform_2(%arg0: i32) -> (i32, i32) {
    %c0_i32 = arith.constant 0 : i32
    %c0_i32_0 = arith.constant 0 : i32
    %c0_i32_1 = arith.constant 0 : i32
    return %c0_i32, %c0_i32_0 : i32, i32
  }
  func.func @transform_3(%arg0: i32) -> (i32, i32) {
    %c0_i32 = arith.constant 0 : i32
    %c0_i32_0 = arith.constant 0 : i32
    %c0_i32_1 = arith.constant 0 : i32
    return %c0_i32, %c0_i32_0 : i32, i32
  }
  func.func @transform_4(%arg0: i32) -> (i32, i32) {
    %c0_i32 = arith.constant 0 : i32
    %c0_i32_0 = arith.constant 0 : i32
    %c0_i32_1 = arith.constant 0 : i32
    return %c0_i32, %c0_i32_0 : i32, i32
  }
  func.func @transform_5(%arg0: i32) -> (i32, i32) {
    %c0_i32 = arith.constant 0 : i32
    %c0_i32_0 = arith.constant 0 : i32
    %c0_i32_1 = arith.constant 0 : i32
    return %c0_i32, %c0_i32_0 : i32, i32
  }
  func.func @transform_6(%arg0: i32) -> (i32, i32) {
    %c0_i32 = arith.constant 0 : i32
    %c0_i32_0 = arith.constant 0 : i32
    %c0_i32_1 = arith.constant 0 : i32
    return %c0_i32, %c0_i32_0 : i32, i32
  }
  func.func @transform_7(%arg0: i32) -> (i32, i32, i32) {
    %c0_i32 = arith.constant 0 : i32
    %c0_i32_0 = arith.constant 0 : i32
    %c0_i32_1 = arith.constant 0 : i32
    return %arg0, %c0_i32, %c0_i32_0 : i32, i32, i32
  }
}

</mosaic_0001>

<llo_original>
// kernel: tpu_custom_call.1
$region0: #{tpu_custom_call.1}
  #allocation0 [shape = 'u32[]', space=smem, size = 0x4, offset = 0x4, fixed_abs, tag = 'smem constant byte address 0x4 - core index']
  #allocation1 [shape = 'u32[144,128]{1,0:T(1,128)}', space=vmem, size = 0x12000, scoped, tag = 'internal scratch']
  #allocation2 [shape = 'f32[1,1]{1,0:T(1,128)S(1)}', space=vmem, size = 0x200, scoped, tag = 'scoped memory for tpu_custom_call.1']
  %s0 = inlined_call_operand.vmem [shape: f32[128,32], index: 0, kind: input, shape index: {}]
  %s1 = inlined_call_operand.vmem [shape: f32[128,4], index: 1, kind: input, shape index: {}]
  %s2 = inlined_call_operand.vmem [shape: f32[32,256], index: 2, kind: input, shape index: {}]
  %s3 = inlined_call_operand.vmem [shape: f32[1,256], index: 3, kind: input, shape index: {}]
  %s4 = inlined_call_operand.vmem [shape: f32[4,128], index: 4, kind: input, shape index: {}]
  %s5 = inlined_call_operand.vmem [shape: f32[1,32], index: 5, kind: input, shape index: {}]
  %s6 = inlined_call_operand.<no memory space> [shape: f32[1,1], index: 6, kind: input, shape index: {}]
  %s7 = inlined_call_operand.hbm [shape: f32[1,1,128], index: 7, kind: output, shape index: {}]
  %s8 = sld [smem:[#allocation0]]
  $region38: #{tpu_custom_call.1} parent=0
    _
  %s10 = ssub.s32 1, %s8
  %s11 = scalar_select 0, %s10, %s8
  %v12 = vstv %s6
  %13 = vst [vmem:[#allocation2] sm:$0x1] %v12
  $region1: #{tpu_custom_call.1} parent=0
    #allocation3 [shape = 'u8[512]{0}', space=vmem, size = 0x400, scoped, tag = 'output window, operand 0, single buffered']
    #allocation4 [shape = 's32[1]{0}', space=sflag, size = 0x4, scoped, tag = 'scoped memory for tpu_custom_call.1']
    %14 = vsyncpa [#allocation4], 0
    // Predicated region
    $region2: #{tpu_custom_call.1} parent=1 // pred_check
      _
    $region3: #{tpu_custom_call.1} parent=1 // pred_check_branch
      %16 = sbr.rel (0) target = $region5
    $region4: #{tpu_custom_call.1} parent=1 // pred_region
      _
    $region5: #{tpu_custom_call.1} parent=1 // pred_fallthru
      _
    // Predicated region
    $region6: #{tpu_custom_call.1} parent=1 // pred_check
      _
    $region7: #{tpu_custom_call.1} parent=1 // pred_check_branch
      %18 = sbr.rel (0) target = $region9
    $region8: #{tpu_custom_call.1} parent=1 // pred_region
      _
    $region9: #{tpu_custom_call.1} parent=1 // pred_fallthru
      _
    // Predicated region
    $region10: #{tpu_custom_call.1} parent=1 // pred_check
      _
    $region11: #{tpu_custom_call.1} parent=1 // pred_check_branch
      %20 = sbr.rel (0) target = $region13
    $region12: #{tpu_custom_call.1} parent=1 // pred_region
      _
    $region13: #{tpu_custom_call.1} parent=1 // pred_fallthru
      _
    // Predicated region
    $region14: #{tpu_custom_call.1} parent=1 // pred_check
      _
    $region15: #{tpu_custom_call.1} parent=1 // pred_check_branch
      %22 = sbr.rel (0) target = $region17
    $region16: #{tpu_custom_call.1} parent=1 // pred_region
      _
    $region17: #{tpu_custom_call.1} parent=1 // pred_fallthru
      _
    // Predicated region
    $region18: #{tpu_custom_call.1} parent=1 // pred_check
      _
    $region19: #{tpu_custom_call.1} parent=1 // pred_check_branch
      %24 = sbr.rel (0) target = $region21
    $region20: #{tpu_custom_call.1} parent=1 // pred_region
      _
    $region21: #{tpu_custom_call.1} parent=1 // pred_fallthru
      _
    // Predicated region
    $region22: #{tpu_custom_call.1} parent=1 // pred_check
      _
    $region23: #{tpu_custom_call.1} parent=1 // pred_check_branch
      %26 = sbr.rel (0) target = $region25
    $region24: #{tpu_custom_call.1} parent=1 // pred_region
      _
    $region25: #{tpu_custom_call.1} parent=1 // pred_fallthru
      _
    // Predicated region
    $region26: #{tpu_custom_call.1} parent=1 // pred_check
      _
    $region27: #{tpu_custom_call.1} parent=1 // pred_check_branch
      %28 = sbr.rel (0) target = $region29
    $region28: #{tpu_custom_call.1} parent=1 // pred_region
      _
    $region29: #{tpu_custom_call.1} parent=1 // pred_fallthru
      _
    %v29 = vld [vmem:[%s0] sm:$0xff]
    %v30 = vld [vmem:[%s0 + $0x8] sm:$0xff]
    %v31 = vld [vmem:[%s0 + $0x10] sm:$0xff]
    %v32 = vld [vmem:[%s0 + $0x18] sm:$0xff]
    %v33 = vld [vmem:[%s0 + $0x20] sm:$0xff]
    %v34 = vld [vmem:[%s0 + $0x28] sm:$0xff]
    %v35 = vld [vmem:[%s0 + $0x30] sm:$0xff]
    %v36 = vld [vmem:[%s0 + $0x38] sm:$0xff]
    %v37 = vld [vmem:[%s0 + $0x40] sm:$0xff]
    %v38 = vld [vmem:[%s0 + $0x48] sm:$0xff]
    %v39 = vld [vmem:[%s0 + $0x50] sm:$0xff]
    %v40 = vld [vmem:[%s0 + $0x58] sm:$0xff]
    %v41 = vld [vmem:[%s0 + $0x60] sm:$0xff]
    %v42 = vld [vmem:[%s0 + $0x68] sm:$0xff]
    %v43 = vld [vmem:[%s0 + $0x70] sm:$0xff]
    %v44 = vld [vmem:[%s0 + $0x78] sm:$0xff]
    %v45 = vld [vmem:[%s2] sm:$0xff]
    %v46 = vld [vmem:[%s2 + $0x8] sm:$0xff]
    %v47 = vld [vmem:[%s2 + $0x10] sm:$0xff]
    %v48 = vld [vmem:[%s2 + $0x18] sm:$0xff]
    %v49 = vld [vmem:[%s2 + $0x20] sm:$0xff]
    %v50 = vld [vmem:[%s2 + $0x28] sm:$0xff]
    %v51 = vld [vmem:[%s2 + $0x30] sm:$0xff]
    %v52 = vld [vmem:[%s2 + $0x38] sm:$0xff]
    %v53 = vld [vmem:[%s3] sm:$0x3]
    %v55 = vlaneseq
    %v56 = vshrl.u32 %v55, 7
    %v57 = vsub.s32 0, %v56
    %v58 = vrot.slane %v53, %v57
    %v59 = vlaneseq
    %v60 = vshrl.u32 %v59, 7
    %v61 = vsub.s32 1, %v60
    %v62 = vrot.slane %v53, %v61
    %vm65 = vcmask 261120
    %v67 = vsel %vm65, %v29, 0
    %v70 = vsel %vm65, %v30, 0
    %v73 = vsel %vm65, %v31, 0
    %v76 = vsel %vm65, %v32, 0
    %v79 = vsel %vm65, %v33, 0
    %v82 = vsel %vm65, %v34, 0
    %v85 = vsel %vm65, %v35, 0
    %v88 = vsel %vm65, %v36, 0
    %v91 = vsel %vm65, %v37, 0
    %v94 = vsel %vm65, %v38, 0
    %v97 = vsel %vm65, %v39, 0
    %v100 = vsel %vm65, %v40, 0
    %v103 = vsel %vm65, %v41, 0
    %v106 = vsel %vm65, %v42, 0
    %v109 = vsel %vm65, %v43, 0
    %v112 = vsel %vm65, %v44, 0
    %114 = vmatprep.subr.mxu0 0.0
    %115 = vmatpush1.msra.mxu0 0.0
    %116 = vmatprep.subr.mxu0 0.0
    %117 = vmatpush1.msra.mxu0 0.0
    %118 = vmatprep.subr.mxu0 0.0
    %119 = vmatpush1.msra.mxu0 0.0
    %120 = vmatprep.subr.mxu0 0.0
    %121 = vmatpush1.msra.mxu0 0.0
    %122 = vmatprep.subr.mxu0 0.0
    %123 = vmatpush1.msra.mxu0 0.0
    %124 = vmatprep.subr.mxu0 0.0
    %125 = vmatpush1.msra.mxu0 0.0
    %126 = vmatprep.subr.mxu0 0.0
    %127 = vmatpush1.msra.mxu0 0.0
    %128 = vmatprep.subr.mxu0 0.0
    %129 = vmatpush1.msra.mxu0 0.0
    %130 = vmatprep.subr.mxu0 0.0
    %131 = vmatpush1.msra.mxu0 0.0
    %132 = vmatprep.subr.mxu0 0.0
    %133 = vmatpush1.msra.mxu0 0.0
    %134 = vmatprep.subr.mxu0 0.0
    %135 = vmatpush1.msra.mxu0 0.0
    %136 = vmatprep.subr.mxu0 0.0
    %137 = vmatpush1.msra.mxu0 0.0
    %138 = vmatprep.subr.mxu0 %v52
    %139 = vmatpush1.msra.mxu0 %v51
    %140 = vmatprep.subr.mxu0 %v50
    %141 = vmatpush1.msra.mxu0 %v49
    %142 = vmatprep.subr.mxu0 %v48
    %143 = vmatpush1.msra.mxu0 %v47
    %144 = vmatprep.subr.mxu0 %v46
    %145 = vmatpush1.msra.mxu0 %v45
    %146 = vmatprep.subr.mxu0 0.0
    %147 = vmatpush2.msra.mxu0 0.0
    %148 = vmatprep.subr.mxu0 0.0
    %149 = vmatpush2.msra.mxu0 0.0
    %150 = vmatprep.subr.mxu0 0.0
    %151 = vmatpush2.msra.mxu0 0.0
    %152 = vmatprep.subr.mxu0 0.0
    %153 = vmatpush2.msra.mxu0 0.0
    %154 = vmatprep.subr.mxu0 0.0
    %155 = vmatpush2.msra.mxu0 0.0
    %156 = vmatprep.subr.mxu0 0.0
    %157 = vmatpush2.msra.mxu0 0.0
    %158 = vmatprep.subr.mxu0 0.0
    %159 = vmatpush2.msra.mxu0 0.0
    %160 = vmatprep.subr.mxu0 0.0
    %161 = vmatpush2.msra.mxu0 0.0
    %162 = vmatprep.subr.mxu0 0.0
    %163 = vmatpush2.msra.mxu0 0.0
    %164 = vmatprep.subr.mxu0 0.0
    %165 = vmatpush2.msra.mxu0 0.0
    %166 = vmatprep.subr.mxu0 0.0
    %167 = vmatpush2.msra.mxu0 0.0
    %168 = vmatprep.subr.mxu0 0.0
    %169 = vmatpush2.msra.mxu0 0.0
    %170 = vmatprep.subr.mxu0 0.0
    %171 = vmatpush2.msra.mxu0 0.0
    %172 = vmatprep.subr.mxu0 0.0
    %173 = vmatpush2.msra.mxu0 0.0
    %174 = vmatprep.subr.mxu0 0.0
    %175 = vmatpush2.msra.mxu0 0.0
    %176 = vmatprep.subr.mxu0 0.0
    %177 = vmatpush2.msra.mxu0 0.0
    %178 = vmatprep.mubr.f32.mxu0 0.0
    %179 = vmatmul.mubr.f32.gmra.mxu0 %v67
    %v180 = vpop.f32.mrf.mxu0
    %v181 = vadd.f32 %v58, %v180
    %v182 = vpop.f32.mrf.mxu0
    %v183 = vadd.f32 %v62, %v182
    %184 = vmatprep.mubr.f32.mxu0 0.0
    %185 = vmatmul.mubr.f32.gmra.mxu0 %v70
    %v186 = vpop.f32.mrf.mxu0
    %v187 = vadd.f32 %v58, %v186
    %v188 = vpop.f32.mrf.mxu0
    %v189 = vadd.f32 %v62, %v188
    %190 = vmatprep.mubr.f32.mxu0 0.0
    %191 = vmatmul.mubr.f32.gmra.mxu0 %v73
    %v192 = vpop.f32.mrf.mxu0
    %v193 = vadd.f32 %v58, %v192
    %v194 = vpop.f32.mrf.mxu0
    %v195 = vadd.f32 %v62, %v194
    %196 = vmatprep.mubr.f32.mxu0 0.0
    %197 = vmatmul.mubr.f32.gmra.mxu0 %v76
    %v198 = vpop.f32.mrf.mxu0
    %v199 = vadd.f32 %v58, %v198
    %v200 = vpop.f32.mrf.mxu0
    %v201 = vadd.f32 %v62, %v200
    %202 = vmatprep.mubr.f32.mxu0 0.0
    %203 = vmatmul.mubr.f32.gmra.mxu0 %v79
    %v204 = vpop.f32.mrf.mxu0
    %v205 = vadd.f32 %v58, %v204
    %v206 = vpop.f32.mrf.mxu0
    %v207 = vadd.f32 %v62, %v206
    %208 = vmatprep.mubr.f32.mxu0 0.0
    %209 = vmatmul.mubr.f32.gmra.mxu0 %v82
    %v210 = vpop.f32.mrf.mxu0
    %v211 = vadd.f32 %v58, %v210
    %v212 = vpop.f32.mrf.mxu0
    %v213 = vadd.f32 %v62, %v212
    %214 = vmatprep.mubr.f32.mxu0 0.0
    %215 = vmatmul.mubr.f32.gmra.mxu0 %v85
    %v216 = vpop.f32.mrf.mxu0
    %v217 = vadd.f32 %v58, %v216
    %v218 = vpop.f32.mrf.mxu0
    %v219 = vadd.f32 %v62, %v218
    %220 = vmatprep.mubr.f32.mxu0 0.0
    %221 = vmatmul.mubr.f32.gmra.mxu0 %v88
    %v222 = vpop.f32.mrf.mxu0
    %v223 = vadd.f32 %v58, %v222
    %v224 = vpop.f32.mrf.mxu0
    %v225 = vadd.f32 %v62, %v224
    %226 = vmatprep.mubr.f32.mxu0 0.0
    %227 = vmatmul.mubr.f32.gmra.mxu0 %v91
    %v228 = vpop.f32.mrf.mxu0
    %v229 = vadd.f32 %v58, %v228
    %v230 = vpop.f32.mrf.mxu0
    %v231 = vadd.f32 %v62, %v230
    %232 = vmatprep.mubr.f32.mxu0 0.0
    %233 = vmatmul.mubr.f32.gmra.mxu0 %v94
    %v234 = vpop.f32.mrf.mxu0
    %v235 = vadd.f32 %v58, %v234
    %v236 = vpop.f32.mrf.mxu0
    %v237 = vadd.f32 %v62, %v236
    %238 = vmatprep.mubr.f32.mxu0 0.0
    %239 = vmatmul.mubr.f32.gmra.mxu0 %v97
    %v240 = vpop.f32.mrf.mxu0
    %v241 = vadd.f32 %v58, %v240
    %v242 = vpop.f32.mrf.mxu0
    %v243 = vadd.f32 %v62, %v242
    %244 = vmatprep.mubr.f32.mxu0 0.0
    %245 = vmatmul.mubr.f32.gmra.mxu0 %v100
    %v246 = vpop.f32.mrf.mxu0
    %v247 = vadd.f32 %v58, %v246
    %v248 = vpop.f32.mrf.mxu0
    %v249 = vadd.f32 %v62, %v248
    %250 = vmatprep.mubr.f32.mxu0 0.0
    %251 = vmatmul.mubr.f32.gmra.mxu0 %v103
    %v252 = vpop.f32.mrf.mxu0
    %v253 = vadd.f32 %v58, %v252
    %v254 = vpop.f32.mrf.mxu0
    %v255 = vadd.f32 %v62, %v254
    %256 = vmatprep.mubr.f32.mxu0 0.0
    %257 = vmatmul.mubr.f32.gmra.mxu0 %v106
    %v258 = vpop.f32.mrf.mxu0
    %v259 = vadd.f32 %v58, %v258
    %v260 = vpop.f32.mrf.mxu0
    %v261 = vadd.f32 %v62, %v260
    %262 = vmatprep.mubr.f32.mxu0 0.0
    %263 = vmatmul.mubr.f32.gmra.mxu0 %v109
    %v264 = vpop.f32.mrf.mxu0
    %v265 = vadd.f32 %v58, %v264
    %v266 = vpop.f32.mrf.mxu0
    %v267 = vadd.f32 %v62, %v266
    %268 = vmatprep.mubr.f32.mxu0 0.0
    %269 = vmatmul.mubr.f32.gmra.mxu0 %v112
    %v270 = vpop.f32.mrf.mxu0
    %v271 = vadd.f32 %v58, %v270
    %v272 = vpop.f32.mrf.mxu0
    %v273 = vadd.f32 %v62, %v272
    %274 = vdwg.mxu0
    %v275 = vld [vmem:[%s1] sm:$0xff]
    %v276 = vld [vmem:[%s1 + $0x8] sm:$0xff]
    %v277 = vld [vmem:[%s1 + $0x10] sm:$0xff]
    %v278 = vld [vmem:[%s1 + $0x18] sm:$0xff]
    %v279 = vld [vmem:[%s1 + $0x20] sm:$0xff]
    %v280 = vld [vmem:[%s1 + $0x28] sm:$0xff]
    %v281 = vld [vmem:[%s1 + $0x30] sm:$0xff]
    %v282 = vld [vmem:[%s1 + $0x38] sm:$0xff]
    %v283 = vld [vmem:[%s1 + $0x40] sm:$0xff]
    %v284 = vld [vmem:[%s1 + $0x48] sm:$0xff]
    %v285 = vld [vmem:[%s1 + $0x50] sm:$0xff]
    %v286 = vld [vmem:[%s1 + $0x58] sm:$0xff]
    %v287 = vld [vmem:[%s1 + $0x60] sm:$0xff]
    %v288 = vld [vmem:[%s1 + $0x68] sm:$0xff]
    %v289 = vld [vmem:[%s1 + $0x70] sm:$0xff]
    %v290 = vld [vmem:[%s1 + $0x78] sm:$0xff]
    %v291 = vld [vmem:[%s4] sm:$0xf]
    %vm292 = vcmask 31744
    %v294 = vsel %vm292, %v275, 0
    %v297 = vsel %vm292, %v276, 0
    %v300 = vsel %vm292, %v277, 0
    %v303 = vsel %vm292, %v278, 0
    %v306 = vsel %vm292, %v279, 0
    %v309 = vsel %vm292, %v280, 0
    %v312 = vsel %vm292, %v281, 0
    %v315 = vsel %vm292, %v282, 0
    %v318 = vsel %vm292, %v283, 0
    %v321 = vsel %vm292, %v284, 0
    %v324 = vsel %vm292, %v285, 0
    %v327 = vsel %vm292, %v286, 0
    %v330 = vsel %vm292, %v287, 0
    %v333 = vsel %vm292, %v288, 0
    %v336 = vsel %vm292, %v289, 0
    %v339 = vsel %vm292, %v290, 0
    %vm341 = vcmask 1043456
    %v343 = vsel %vm341, %v291, 0
    %345 = vmatprep.subr.mxu0 0.0
    %346 = vmatpush1.msra.mxu0 0.0
    %347 = vmatprep.subr.mxu0 0.0
    %348 = vmatpush1.msra.mxu0 0.0
    %349 = vmatprep.subr.mxu0 0.0
    %350 = vmatpush1.msra.mxu0 0.0
    %351 = vmatprep.subr.mxu0 0.0
    %352 = vmatpush1.msra.mxu0 0.0
    %353 = vmatprep.subr.mxu0 0.0
    %354 = vmatpush1.msra.mxu0 0.0
    %355 = vmatprep.subr.mxu0 0.0
    %356 = vmatpush1.msra.mxu0 0.0
    %357 = vmatprep.subr.mxu0 0.0
    %358 = vmatpush1.msra.mxu0 0.0
    %359 = vmatprep.subr.mxu0 0.0
    %360 = vmatpush1.msra.mxu0 0.0
    %361 = vmatprep.subr.mxu0 0.0
    %362 = vmatpush1.msra.mxu0 0.0
    %363 = vmatprep.subr.mxu0 0.0
    %364 = vmatpush1.msra.mxu0 0.0
    %365 = vmatprep.subr.mxu0 0.0
    %366 = vmatpush1.msra.mxu0 0.0
    %367 = vmatprep.subr.mxu0 0.0
    %368 = vmatpush1.msra.mxu0 0.0
    %369 = vmatprep.subr.mxu0 0.0
    %370 = vmatpush1.msra.mxu0 0.0
    %371 = vmatprep.subr.mxu0 0.0
    %372 = vmatpush1.msra.mxu0 0.0
    %373 = vmatprep.subr.mxu0 0.0
    %374 = vmatpush1.msra.mxu0 0.0
    %375 = vmatprep.subr.mxu0 0.0
    %376 = vmatpush1.msra.mxu0 %v343
    %377 = vmatprep.subr.mxu0 0.0
    %378 = vmatpush2.msra.mxu0 0.0
    %379 = vmatprep.subr.mxu0 0.0
    %380 = vmatpush2.msra.mxu0 0.0
    %381 = vmatprep.subr.mxu0 0.0
    %382 = vmatpush2.msra.mxu0 0.0
    %383 = vmatprep.subr.mxu0 0.0
    %384 = vmatpush2.msra.mxu0 0.0
    %385 = vmatprep.subr.mxu0 0.0
    %386 = vmatpush2.msra.mxu0 0.0
    %387 = vmatprep.subr.mxu0 0.0
    %388 = vmatpush2.msra.mxu0 0.0
    %389 = vmatprep.subr.mxu0 0.0
    %390 = vmatpush2.msra.mxu0 0.0
    %391 = vmatprep.subr.mxu0 0.0
    %392 = vmatpush2.msra.mxu0 0.0
    %393 = vmatprep.subr.mxu0 0.0
    %394 = vmatpush2.msra.mxu0 0.0
    %395 = vmatprep.subr.mxu0 0.0
    %396 = vmatpush2.msra.mxu0 0.0
    %397 = vmatprep.subr.mxu0 0.0
    %398 = vmatpush2.msra.mxu0 0.0
    %399 = vmatprep.subr.mxu0 0.0
    %400 = vmatpush2.msra.mxu0 0.0
    %401 = vmatprep.subr.mxu0 0.0
    %402 = vmatpush2.msra.mxu0 0.0
    %403 = vmatprep.subr.mxu0 0.0
    %404 = vmatpush2.msra.mxu0 0.0
    %405 = vmatprep.subr.mxu0 0.0
    %406 = vmatpush2.msra.mxu0 0.0
    %407 = vmatprep.subr.mxu0 0.0
    %408 = vmatpush2.msra.mxu0 0.0
    %409 = vmatprep.mubr.f32.mxu0 0.0
    %410 = vmatmul.mubr.f32.gmra.mxu0 %v294
    %v411 = vpop.f32.mrf.mxu0
    %v412 = vadd.f32 0.0, %v411
    %v413 = vpop.f32.mrf.mxu0
    %414 = vmatprep.mubr.f32.mxu0 0.0
    %415 = vmatmul.mubr.f32.gmra.mxu0 %v297
    %v416 = vpop.f32.mrf.mxu0
    %v417 = vadd.f32 0.0, %v416
    %v418 = vpop.f32.mrf.mxu0
    %419 = vmatprep.mubr.f32.mxu0 0.0
    %420 = vmatmul.mubr.f32.gmra.mxu0 %v300
    %v421 = vpop.f32.mrf.mxu0
    %v422 = vadd.f32 0.0, %v421
    %v423 = vpop.f32.mrf.mxu0
    %424 = vmatprep.mubr.f32.mxu0 0.0
    %425 = vmatmul.mubr.f32.gmra.mxu0 %v303
    %v426 = vpop.f32.mrf.mxu0
    %v427 = vadd.f32 0.0, %v426
    %v428 = vpop.f32.mrf.mxu0
    %429 = vmatprep.mubr.f32.mxu0 0.0
    %430 = vmatmul.mubr.f32.gmra.mxu0 %v306
    %v431 = vpop.f32.mrf.mxu0
    %v432 = vadd.f32 0.0, %v431
    %v433 = vpop.f32.mrf.mxu0
    %434 = vmatprep.mubr.f32.mxu0 0.0
    %435 = vmatmul.mubr.f32.gmra.mxu0 %v309
    %v436 = vpop.f32.mrf.mxu0
    %v437 = vadd.f32 0.0, %v436
    %v438 = vpop.f32.mrf.mxu0
    %439 = vmatprep.mubr.f32.mxu0 0.0
    %440 = vmatmul.mubr.f32.gmra.mxu0 %v312
    %v441 = vpop.f32.mrf.mxu0
    %v442 = vadd.f32 0.0, %v441
    %v443 = vpop.f32.mrf.mxu0
    %444 = vmatprep.mubr.f32.mxu0 0.0
    %445 = vmatmul.mubr.f32.gmra.mxu0 %v315
    %v446 = vpop.f32.mrf.mxu0
    %v447 = vadd.f32 0.0, %v446
    %v448 = vpop.f32.mrf.mxu0
    %449 = vmatprep.mubr.f32.mxu0 0.0
    %450 = vmatmul.mubr.f32.gmra.mxu0 %v318
    %v451 = vpop.f32.mrf.mxu0
    %v452 = vadd.f32 0.0, %v451
    %v453 = vpop.f32.mrf.mxu0
    %454 = vmatprep.mubr.f32.mxu0 0.0
    %455 = vmatmul.mubr.f32.gmra.mxu0 %v321
    %v456 = vpop.f32.mrf.mxu0
    %v457 = vadd.f32 0.0, %v456
    %v458 = vpop.f32.mrf.mxu0
    %459 = vmatprep.mubr.f32.mxu0 0.0
    %460 = vmatmul.mubr.f32.gmra.mxu0 %v324
    %v461 = vpop.f32.mrf.mxu0
    %v462 = vadd.f32 0.0, %v461
    %v463 = vpop.f32.mrf.mxu0
    %464 = vmatprep.mubr.f32.mxu0 0.0
    %465 = vmatmul.mubr.f32.gmra.mxu0 %v327
    %v466 = vpop.f32.mrf.mxu0
    %v467 = vadd.f32 0.0, %v466
    %v468 = vpop.f32.mrf.mxu0
    %469 = vmatprep.mubr.f32.mxu0 0.0
    %470 = vmatmul.mubr.f32.gmra.mxu0 %v330
    %v471 = vpop.f32.mrf.mxu0
    %v472 = vadd.f32 0.0, %v471
    %v473 = vpop.f32.mrf.mxu0
    %474 = vmatprep.mubr.f32.mxu0 0.0
    %475 = vmatmul.mubr.f32.gmra.mxu0 %v333
    %v476 = vpop.f32.mrf.mxu0
    %v477 = vadd.f32 0.0, %v476
    %v478 = vpop.f32.mrf.mxu0
    %479 = vmatprep.mubr.f32.mxu0 0.0
    %480 = vmatmul.mubr.f32.gmra.mxu0 %v336
    %v481 = vpop.f32.mrf.mxu0
    %v482 = vadd.f32 0.0, %v481
    %v483 = vpop.f32.mrf.mxu0
    %484 = vmatprep.mubr.f32.mxu0 0.0
    %485 = vmatmul.mubr.f32.gmra.mxu0 %v339
    %v486 = vpop.f32.mrf.mxu0
    %v487 = vadd.f32 0.0, %v486
    %v488 = vpop.f32.mrf.mxu0
    %489 = vdwg.mxu0
    %v490 = vand.u32 2147483647, %v181
    %v491 = vand.u32 2147483647, %v187
    %v492 = vand.u32 2147483647, %v193
    %v493 = vand.u32 2147483647, %v199
    %v494 = vand.u32 2147483647, %v205
    %v495 = vand.u32 2147483647, %v211
    %v496 = vand.u32 2147483647, %v217
    %v497 = vand.u32 2147483647, %v223
    %v498 = vand.u32 2147483647, %v229
    %v499 = vand.u32 2147483647, %v235
    %v500 = vand.u32 2147483647, %v241
    %v501 = vand.u32 2147483647, %v247
    %v502 = vand.u32 2147483647, %v253
    %v503 = vand.u32 2147483647, %v259
    %v504 = vand.u32 2147483647, %v265
    %v505 = vand.u32 2147483647, %v271
    %v506 = vand.u32 2147483647, %v183
    %v507 = vand.u32 2147483647, %v189
    %v508 = vand.u32 2147483647, %v195
    %v509 = vand.u32 2147483647, %v201
    %v510 = vand.u32 2147483647, %v207
    %v511 = vand.u32 2147483647, %v213
    %v512 = vand.u32 2147483647, %v219
    %v513 = vand.u32 2147483647, %v225
    %v514 = vand.u32 2147483647, %v231
    %v515 = vand.u32 2147483647, %v237
    %v516 = vand.u32 2147483647, %v243
    %v517 = vand.u32 2147483647, %v249
    %v518 = vand.u32 2147483647, %v255
    %v519 = vand.u32 2147483647, %v261
    %v520 = vand.u32 2147483647, %v267
    %v521 = vand.u32 2147483647, %v273
    %v522 = vmax.f32 %v183, 0.0
    %v523 = vmax.f32 %v189, 0.0
    %v524 = vmax.f32 %v195, 0.0
    %v525 = vmax.f32 %v201, 0.0
    %v526 = vmax.f32 %v207, 0.0
    %v527 = vmax.f32 %v213, 0.0
    %v528 = vmax.f32 %v219, 0.0
    %v529 = vmax.f32 %v225, 0.0
    %v530 = vmax.f32 %v231, 0.0
    %v531 = vmax.f32 %v237, 0.0
    %v532 = vmax.f32 %v243, 0.0
    %v533 = vmax.f32 %v249, 0.0
    %v534 = vmax.f32 %v255, 0.0
    %v535 = vmax.f32 %v261, 0.0
    %v536 = vmax.f32 %v267, 0.0
    %v537 = vmax.f32 %v273, 0.0
    %v538 = vmul.f32 %v490, %v412
    %v539 = vmul.f32 %v491, %v417
    %v540 = vmul.f32 %v492, %v422
    %v541 = vmul.f32 %v493, %v427
    %v542 = vmul.f32 %v494, %v432
    %v543 = vmul.f32 %v495, %v437
    %v544 = vmul.f32 %v496, %v442
    %v545 = vmul.f32 %v497, %v447
    %v546 = vmul.f32 %v498, %v452
    %v547 = vmul.f32 %v499, %v457
    %v548 = vmul.f32 %v500, %v462
    %v549 = vmul.f32 %v501, %v467
    %v550 = vmul.f32 %v502, %v472
    %v551 = vmul.f32 %v503, %v477
    %v552 = vmul.f32 %v504, %v482
    %v553 = vmul.f32 %v505, %v487
    %554 = vrot.lane.b32.xlu0 %v538, 64
    %v555 = vpop.permute.xlu0 %554
    %556 = vrot.lane.b32.xlu0 %v539, 64
    %v557 = vpop.permute.xlu0 %556
    %558 = vrot.lane.b32.xlu0 %v540, 64
    %v559 = vpop.permute.xlu0 %558
    %560 = vrot.lane.b32.xlu0 %v541, 64
    %v561 = vpop.permute.xlu0 %560
    %562 = vrot.lane.b32.xlu0 %v542, 64
    %v563 = vpop.permute.xlu0 %562
    %564 = vrot.lane.b32.xlu0 %v543, 64
    %v565 = vpop.permute.xlu0 %564
    %566 = vrot.lane.b32.xlu0 %v544, 64
    %v567 = vpop.permute.xlu0 %566
    %568 = vrot.lane.b32.xlu0 %v545, 64
    %v569 = vpop.permute.xlu0 %568
    %570 = vrot.lane.b32.xlu0 %v546, 64
    %v571 = vpop.permute.xlu0 %570
    %572 = vrot.lane.b32.xlu0 %v547, 64
    %v573 = vpop.permute.xlu0 %572
    %574 = vrot.lane.b32.xlu0 %v548, 64
    %v575 = vpop.permute.xlu0 %574
    %576 = vrot.lane.b32.xlu0 %v549, 64
    %v577 = vpop.permute.xlu0 %576
    %578 = vrot.lane.b32.xlu0 %v550, 64
    %v579 = vpop.permute.xlu0 %578
    %580 = vrot.lane.b32.xlu0 %v551, 64
    %v581 = vpop.permute.xlu0 %580
    %582 = vrot.lane.b32.xlu0 %v552, 64
    %v583 = vpop.permute.xlu0 %582
    %584 = vrot.lane.b32.xlu0 %v553, 64
    %v585 = vpop.permute.xlu0 %584
    %v586 = vadd.f32 %v538, %v555
    %v587 = vadd.f32 %v539, %v557
    %v588 = vadd.f32 %v540, %v559
    %v589 = vadd.f32 %v541, %v561
    %v590 = vadd.f32 %v542, %v563
    %v591 = vadd.f32 %v543, %v565
    %v592 = vadd.f32 %v544, %v567
    %v593 = vadd.f32 %v545, %v569
    %v594 = vadd.f32 %v546, %v571
    %v595 = vadd.f32 %v547, %v573
    %v596 = vadd.f32 %v548, %v575
    %v597 = vadd.f32 %v549, %v577
    %v598 = vadd.f32 %v550, %v579
    %v599 = vadd.f32 %v551, %v581
    %v600 = vadd.f32 %v552, %v583
    %v601 = vadd.f32 %v553, %v585
    %602 = vrot.lane.b32.xlu0 %v586, 32
    %v603 = vpop.permute.xlu0 %602
    %604 = vrot.lane.b32.xlu0 %v587, 32
    %v605 = vpop.permute.xlu0 %604
    %606 = vrot.lane.b32.xlu0 %v588, 32
    %v607 = vpop.permute.xlu0 %606
    %608 = vrot.lane.b32.xlu0 %v589, 32
    %v609 = vpop.permute.xlu0 %608
    %610 = vrot.lane.b32.xlu0 %v590, 32
    %v611 = vpop.permute.xlu0 %610
    %612 = vrot.lane.b32.xlu0 %v591, 32
    %v613 = vpop.permute.xlu0 %612
    %614 = vrot.lane.b32.xlu0 %v592, 32
    %v615 = vpop.permute.xlu0 %614
    %616 = vrot.lane.b32.xlu0 %v593, 32
    %v617 = vpop.permute.xlu0 %616
    %618 = vrot.lane.b32.xlu0 %v594, 32
    %v619 = vpop.permute.xlu0 %618
    %620 = vrot.lane.b32.xlu0 %v595, 32
    %v621 = vpop.permute.xlu0 %620
    %622 = vrot.lane.b32.xlu0 %v596, 32
    %v623 = vpop.permute.xlu0 %622
    %624 = vrot.lane.b32.xlu0 %v597, 32
    %v625 = vpop.permute.xlu0 %624
    %626 = vrot.lane.b32.xlu0 %v598, 32
    %v627 = vpop.permute.xlu0 %626
    %628 = vrot.lane.b32.xlu0 %v599, 32
    %v629 = vpop.permute.xlu0 %628
    %630 = vrot.lane.b32.xlu0 %v600, 32
    %v631 = vpop.permute.xlu0 %630
    %632 = vrot.lane.b32.xlu0 %v601, 32
    %v633 = vpop.permute.xlu0 %632
    %v634 = vadd.f32 %v586, %v603
    %v635 = vadd.f32 %v587, %v605
    %v636 = vadd.f32 %v588, %v607
    %v637 = vadd.f32 %v589, %v609
    %v638 = vadd.f32 %v590, %v611
    %v639 = vadd.f32 %v591, %v613
    %v640 = vadd.f32 %v592, %v615
    %v641 = vadd.f32 %v593, %v617
    %v642 = vadd.f32 %v594, %v619
    %v643 = vadd.f32 %v595, %v621
    %v644 = vadd.f32 %v596, %v623
    %v645 = vadd.f32 %v597, %v625
    %v646 = vadd.f32 %v598, %v627
    %v647 = vadd.f32 %v599, %v629
    %v648 = vadd.f32 %v600, %v631
    %v649 = vadd.f32 %v601, %v633
    %v650 = vadd.f32 %v634, %v183
    %v651 = vadd.f32 %v635, %v189
    %v652 = vadd.f32 %v636, %v195
    %v653 = vadd.f32 %v637, %v201
    %v654 = vadd.f32 %v638, %v207
    %v655 = vadd.f32 %v639, %v213
    %v656 = vadd.f32 %v640, %v219
    %v657 = vadd.f32 %v641, %v225
    %v658 = vadd.f32 %v642, %v231
    %v659 = vadd.f32 %v643, %v237
    %v660 = vadd.f32 %v644, %v243
    %v661 = vadd.f32 %v645, %v249
    %v662 = vadd.f32 %v646, %v255
    %v663 = vadd.f32 %v647, %v261
    %v664 = vadd.f32 %v648, %v267
    %v665 = vadd.f32 %v649, %v273
    %vm666 = vcmp.gt.f32.partialorder %v650, 0.0
    %vm667 = vcmp.gt.f32.partialorder %v651, 0.0
    %vm668 = vcmp.gt.f32.partialorder %v652, 0.0
    %vm669 = vcmp.gt.f32.partialorder %v653, 0.0
    %vm670 = vcmp.gt.f32.partialorder %v654, 0.0
    %vm671 = vcmp.gt.f32.partialorder %v655, 0.0
    %vm672 = vcmp.gt.f32.partialorder %v656, 0.0
    %vm673 = vcmp.gt.f32.partialorder %v657, 0.0
    %vm674 = vcmp.gt.f32.partialorder %v658, 0.0
    %vm675 = vcmp.gt.f32.partialorder %v659, 0.0
    %vm676 = vcmp.gt.f32.partialorder %v660, 0.0
    %vm677 = vcmp.gt.f32.partialorder %v661, 0.0
    %vm678 = vcmp.gt.f32.partialorder %v662, 0.0
    %vm679 = vcmp.gt.f32.partialorder %v663, 0.0
    %vm680 = vcmp.gt.f32.partialorder %v664, 0.0
    %vm681 = vcmp.gt.f32.partialorder %v665, 0.0
    %v682 = vmin.f32 %v650, 0.0
    %v683 = vmin.f32 %v651, 0.0
    %v684 = vmin.f32 %v652, 0.0
    %v685 = vmin.f32 %v653, 0.0
    %v686 = vmin.f32 %v654, 0.0
    %v687 = vmin.f32 %v655, 0.0
    %v688 = vmin.f32 %v656, 0.0
    %v689 = vmin.f32 %v657, 0.0
    %v690 = vmin.f32 %v658, 0.0
    %v691 = vmin.f32 %v659, 0.0
    %v692 = vmin.f32 %v660, 0.0
    %v693 = vmin.f32 %v661, 0.0
    %v694 = vmin.f32 %v662, 0.0
    %v695 = vmin.f32 %v663, 0.0
    %v696 = vmin.f32 %v664, 0.0
    %v697 = vmin.f32 %v665, 0.0
    %v698 = vmul.f32 %v682, 1.442695
    %v699 = vpow.pop %v698
    %v700 = vmul.f32 %v683, 1.442695
    %v701 = vpow.pop %v700
    %v702 = vmul.f32 %v684, 1.442695
    %v703 = vpow.pop %v702
    %v704 = vmul.f32 %v685, 1.442695
    %v705 = vpow.pop %v704
    %v706 = vmul.f32 %v686, 1.442695
    %v707 = vpow.pop %v706
    %v708 = vmul.f32 %v687, 1.442695
    %v709 = vpow.pop %v708
    %v710 = vmul.f32 %v688, 1.442695
    %v711 = vpow.pop %v710
    %v712 = vmul.f32 %v689, 1.442695
    %v713 = vpow.pop %v712
    %v714 = vmul.f32 %v690, 1.442695
    %v715 = vpow.pop %v714
    %v716 = vmul.f32 %v691, 1.442695
    %v717 = vpow.pop %v716
    %v718 = vmul.f32 %v692, 1.442695
    %v719 = vpow.pop %v718
    %v720 = vmul.f32 %v693, 1.442695
    %v721 = vpow.pop %v720
    %v722 = vmul.f32 %v694, 1.442695
    %v723 = vpow.pop %v722
    %v724 = vmul.f32 %v695, 1.442695
    %v725 = vpow.pop %v724
    %v726 = vmul.f32 %v696, 1.442695
    %v727 = vpow.pop %v726
    %v728 = vmul.f32 %v697, 1.442695
    %v729 = vpow.pop %v728
    %v730 = vsub.f32 %v699, 1.0
    %v731 = vsub.f32 %v701, 1.0
    %v732 = vsub.f32 %v703, 1.0
    %v733 = vsub.f32 %v705, 1.0
    %v734 = vsub.f32 %v707, 1.0
    %v735 = vsub.f32 %v709, 1.0
    %v736 = vsub.f32 %v711, 1.0
    %v737 = vsub.f32 %v713, 1.0
    %v738 = vsub.f32 %v715, 1.0
    %v739 = vsub.f32 %v717, 1.0
    %v740 = vsub.f32 %v719, 1.0
    %v741 = vsub.f32 %v721, 1.0
    %v742 = vsub.f32 %v723, 1.0
    %v743 = vsub.f32 %v725, 1.0
    %v744 = vsub.f32 %v727, 1.0
    %v745 = vsub.f32 %v729, 1.0
    %v746 = vsel %vm666, %v650, %v730
    %v747 = vsel %vm667, %v651, %v731
    %v748 = vsel %vm668, %v652, %v732
    %v749 = vsel %vm669, %v653, %v733
    %v750 = vsel %vm670, %v654, %v734
    %v751 = vsel %vm671, %v655, %v735
    %v752 = vsel %vm672, %v656, %v736
    %v753 = vsel %vm673, %v657, %v737
    %v754 = vsel %vm674, %v658, %v738
    %v755 = vsel %vm675, %v659, %v739
    %v756 = vsel %vm676, %v660, %v740
    %v757 = vsel %vm677, %v661, %v741
    %v758 = vsel %vm678, %v662, %v742
    %v759 = vsel %vm679, %v663, %v743
    %v760 = vsel %vm680, %v664, %v744
    %v761 = vsel %vm681, %v665, %v745
    %778 = vrot.lane.b32.xlu0 %v506, 96
    %v779 = vpop.permute.xlu0 %778
    %780 = vrot.lane.b32.xlu0 %v507, 96
    %v781 = vpop.permute.xlu0 %780
    %782 = vrot.lane.b32.xlu0 %v508, 96
    %v783 = vpop.permute.xlu0 %782
    %784 = vrot.lane.b32.xlu0 %v509, 96
    %v785 = vpop.permute.xlu0 %784
    %786 = vrot.lane.b32.xlu0 %v510, 96
    %v787 = vpop.permute.xlu0 %786
    %788 = vrot.lane.b32.xlu0 %v511, 96
    %v789 = vpop.permute.xlu0 %788
    %790 = vrot.lane.b32.xlu0 %v512, 96
    %v791 = vpop.permute.xlu0 %790
    %792 = vrot.lane.b32.xlu0 %v513, 96
    %v793 = vpop.permute.xlu0 %792
    %794 = vrot.lane.b32.xlu0 %v514, 96
    %v795 = vpop.permute.xlu0 %794
    %796 = vrot.lane.b32.xlu0 %v515, 96
    %v797 = vpop.permute.xlu0 %796
    %798 = vrot.lane.b32.xlu0 %v516, 96
    %v799 = vpop.permute.xlu0 %798
    %800 = vrot.lane.b32.xlu0 %v517, 96
    %v801 = vpop.permute.xlu0 %800
    %802 = vrot.lane.b32.xlu0 %v518, 96
    %v803 = vpop.permute.xlu0 %802
    %804 = vrot.lane.b32.xlu0 %v519, 96
    %v805 = vpop.permute.xlu0 %804
    %806 = vrot.lane.b32.xlu0 %v520, 96
    %v807 = vpop.permute.xlu0 %806
    %808 = vrot.lane.b32.xlu0 %v521, 96
    %v809 = vpop.permute.xlu0 %808
    %v826 = vmul.f32 %v746, %v779
    %v827 = vmul.f32 %v747, %v781
    %v828 = vmul.f32 %v748, %v783
    %v829 = vmul.f32 %v749, %v785
    %v830 = vmul.f32 %v750, %v787
    %v831 = vmul.f32 %v751, %v789
    %v832 = vmul.f32 %v752, %v791
    %v833 = vmul.f32 %v753, %v793
    %v834 = vmul.f32 %v754, %v795
    %v835 = vmul.f32 %v755, %v797
    %v836 = vmul.f32 %v756, %v799
    %v837 = vmul.f32 %v757, %v801
    %v838 = vmul.f32 %v758, %v803
    %v839 = vmul.f32 %v759, %v805
    %v840 = vmul.f32 %v760, %v807
    %v841 = vmul.f32 %v761, %v809
    %v842 = vld [vmem:[%s5] sm:$0x1]
    %v844 = vlaneseq
    %v845 = vshrl.u32 %v844, 7
    %v846 = vsub.s32 0, %v845
    %v847 = vrot.slane %v842, %v846
    %848 = vrot.lane.b32.xlu0 %v847, 64
    %v849 = vpop.permute.xlu0 %848
    %v851 = vmul.f32 %v522, %v849
    %v852 = vmul.f32 %v523, %v849
    %v853 = vmul.f32 %v524, %v849
    %v854 = vmul.f32 %v525, %v849
    %v855 = vmul.f32 %v526, %v849
    %v856 = vmul.f32 %v527, %v849
    %v857 = vmul.f32 %v528, %v849
    %v858 = vmul.f32 %v529, %v849
    %v859 = vmul.f32 %v530, %v849
    %v860 = vmul.f32 %v531, %v849
    %v861 = vmul.f32 %v532, %v849
    %v862 = vmul.f32 %v533, %v849
    %v863 = vmul.f32 %v534, %v849
    %v864 = vmul.f32 %v535, %v849
    %v865 = vmul.f32 %v536, %v849
    %v866 = vmul.f32 %v537, %v849
    %883 = vrot.lane.b32.xlu0 %v851, 64
    %v884 = vpop.permute.xlu0 %883
    %885 = vrot.lane.b32.xlu0 %v852, 64
    %v886 = vpop.permute.xlu0 %885
    %887 = vrot.lane.b32.xlu0 %v853, 64
    %v888 = vpop.permute.xlu0 %887
    %889 = vrot.lane.b32.xlu0 %v854, 64
    %v890 = vpop.permute.xlu0 %889
    %891 = vrot.lane.b32.xlu0 %v855, 64
    %v892 = vpop.permute.xlu0 %891
    %893 = vrot.lane.b32.xlu0 %v856, 64
    %v894 = vpop.permute.xlu0 %893
    %895 = vrot.lane.b32.xlu0 %v857, 64
    %v896 = vpop.permute.xlu0 %895
    %897 = vrot.lane.b32.xlu0 %v858, 64
    %v898 = vpop.permute.xlu0 %897
    %899 = vrot.lane.b32.xlu0 %v859, 64
    %v900 = vpop.permute.xlu0 %899
    %901 = vrot.lane.b32.xlu0 %v860, 64
    %v902 = vpop.permute.xlu0 %901
    %903 = vrot.lane.b32.xlu0 %v861, 64
    %v904 = vpop.permute.xlu0 %903
    %905 = vrot.lane.b32.xlu0 %v862, 64
    %v906 = vpop.permute.xlu0 %905
    %907 = vrot.lane.b32.xlu0 %v863, 64
    %v908 = vpop.permute.xlu0 %907
    %909 = vrot.lane.b32.xlu0 %v864, 64
    %v910 = vpop.permute.xlu0 %909
    %911 = vrot.lane.b32.xlu0 %v865, 64
    %v912 = vpop.permute.xlu0 %911
    %913 = vrot.lane.b32.xlu0 %v866, 64
    %v914 = vpop.permute.xlu0 %913
    %v931 = vadd.f32 %v826, %v884
    %v932 = vadd.f32 %v827, %v886
    %v933 = vadd.f32 %v828, %v888
    %v934 = vadd.f32 %v829, %v890
    %v935 = vadd.f32 %v830, %v892
    %v936 = vadd.f32 %v831, %v894
    %v937 = vadd.f32 %v832, %v896
    %v938 = vadd.f32 %v833, %v898
    %v939 = vadd.f32 %v834, %v900
    %v940 = vadd.f32 %v835, %v902
    %v941 = vadd.f32 %v836, %v904
    %v942 = vadd.f32 %v837, %v906
    %v943 = vadd.f32 %v838, %v908
    %v944 = vadd.f32 %v839, %v910
    %v945 = vadd.f32 %v840, %v912
    %v946 = vadd.f32 %v841, %v914
    %v947 = vsel %vm65, %v931, 0.0
    %948 = vadd.xlane.f32.xlu0 %v947
    %v949 = vpop.xlane.xlu0 %948
    %v950 = vsel %vm65, %v932, 0.0
    %951 = vadd.xlane.f32.xlu0 %v950
    %v952 = vpop.xlane.xlu0 %951
    %v953 = vsel %vm65, %v933, 0.0
    %954 = vadd.xlane.f32.xlu0 %v953
    %v955 = vpop.xlane.xlu0 %954
    %v956 = vsel %vm65, %v934, 0.0
    %957 = vadd.xlane.f32.xlu0 %v956
    %v958 = vpop.xlane.xlu0 %957
    %v959 = vsel %vm65, %v935, 0.0
    %960 = vadd.xlane.f32.xlu0 %v959
    %v961 = vpop.xlane.xlu0 %960
    %v962 = vsel %vm65, %v936, 0.0
    %963 = vadd.xlane.f32.xlu0 %v962
    %v964 = vpop.xlane.xlu0 %963
    %v965 = vsel %vm65, %v937, 0.0
    %966 = vadd.xlane.f32.xlu0 %v965
    %v967 = vpop.xlane.xlu0 %966
    %v968 = vsel %vm65, %v938, 0.0
    %969 = vadd.xlane.f32.xlu0 %v968
    %v970 = vpop.xlane.xlu0 %969
    %v971 = vsel %vm65, %v939, 0.0
    %972 = vadd.xlane.f32.xlu0 %v971
    %v973 = vpop.xlane.xlu0 %972
    %v974 = vsel %vm65, %v940, 0.0
    %975 = vadd.xlane.f32.xlu0 %v974
    %v976 = vpop.xlane.xlu0 %975
    %v977 = vsel %vm65, %v941, 0.0
    %978 = vadd.xlane.f32.xlu0 %v977
    %v979 = vpop.xlane.xlu0 %978
    %v980 = vsel %vm65, %v942, 0.0
    %981 = vadd.xlane.f32.xlu0 %v980
    %v982 = vpop.xlane.xlu0 %981
    %v983 = vsel %vm65, %v943, 0.0
    %984 = vadd.xlane.f32.xlu0 %v983
    %v985 = vpop.xlane.xlu0 %984
    %v986 = vsel %vm65, %v944, 0.0
    %987 = vadd.xlane.f32.xlu0 %v986
    %v988 = vpop.xlane.xlu0 %987
    %v989 = vsel %vm65, %v945, 0.0
    %990 = vadd.xlane.f32.xlu0 %v989
    %v991 = vpop.xlane.xlu0 %990
    %v992 = vsel %vm65, %v946, 0.0
    %993 = vadd.xlane.f32.xlu0 %v992
    %v994 = vpop.xlane.xlu0 %993
    %v995 = vld [vmem:[#allocation2] sm:$0x1]
    %997 = vset.pattern.permute.xlu0 0
    %998 = vperm.xlu0 %997, %v995
    %v999 = vpop.permute.xlu0 %998
    %v1001 = vlaneseq
    %v1002 = vshrl.u32 %v1001, 7
    %v1003 = vsub.s32 0, %v1002
    %v1004 = vrot.slane %v999, %v1003
    %v1005 = vadd.f32 %v949, %v1004
    %v1006 = vadd.f32 %v952, %v1004
    %v1007 = vadd.f32 %v955, %v1004
    %v1008 = vadd.f32 %v958, %v1004
    %v1009 = vadd.f32 %v961, %v1004
    %v1010 = vadd.f32 %v964, %v1004
    %v1011 = vadd.f32 %v967, %v1004
    %v1012 = vadd.f32 %v970, %v1004
    %v1013 = vadd.f32 %v973, %v1004
    %v1014 = vadd.f32 %v976, %v1004
    %v1015 = vadd.f32 %v979, %v1004
    %v1016 = vadd.f32 %v982, %v1004
    %v1017 = vadd.f32 %v985, %v1004
    %v1018 = vadd.f32 %v988, %v1004
    %v1019 = vadd.f32 %v991, %v1004
    %v1020 = vadd.f32 %v994, %v1004
    %v1037 = vlaneseq
    %v1038 = vand.u32 %v1037, 127
    %v1039 = vlaneseq
    %v1040 = vshrl.u32 %v1039, 7
    %v1041 = vsub.s32 %v1038, %v1040
    %v1042 = vrot.slane %v1005, %v1041
    %v1043 = vadd.s32 %v1038, 4294967288
    %v1044 = vlaneseq
    %v1045 = vshrl.u32 %v1044, 7
    %v1046 = vsub.s32 %v1043, %v1045
    %v1047 = vrot.slane %v1006, %v1046
    %vm1048 = vcmask 130112
    %v1049 = vsel %vm1048, %v1047, %v1042
    %v1050 = vadd.s32 %v1038, 4294967280
    %v1051 = vlaneseq
    %v1052 = vshrl.u32 %v1051, 7
    %v1053 = vsub.s32 %v1050, %v1052
    %v1054 = vrot.slane %v1007, %v1053
    %vm1055 = vcmask 195712
    %v1056 = vsel %vm1055, %v1054, %v1049
    %v1057 = vadd.s32 %v1038, 4294967272
    %v1058 = vlaneseq
    %v1059 = vshrl.u32 %v1058, 7
    %v1060 = vsub.s32 %v1057, %v1059
    %v1061 = vrot.slane %v1008, %v1060
    %vm1062 = vcmask 261312
    %v1063 = vsel %vm1062, %v1061, %v1056
    %v1064 = vadd.s32 %v1038, 4294967264
    %v1065 = vlaneseq
    %v1066 = vshrl.u32 %v1065, 7
    %v1067 = vsub.s32 %v1064, %v1066
    %v1068 = vrot.slane %v1009, %v1067
    %vm1069 = vcmask 326912
    %v1070 = vsel %vm1069, %v1068, %v1063
    %v1071 = vadd.s32 %v1038, 4294967256
    %v1072 = vlaneseq
    %v1073 = vshrl.u32 %v1072, 7
    %v1074 = vsub.s32 %v1071, %v1073
    %v1075 = vrot.slane %v1010, %v1074
    %vm1076 = vcmask 392512
    %v1077 = vsel %vm1076, %v1075, %v1070
    %v1078 = vadd.s32 %v1038, 4294967248
    %v1079 = vlaneseq
    %v1080 = vshrl.u32 %v1079, 7
    %v1081 = vsub.s32 %v1078, %v1080
    %v1082 = vrot.slane %v1011, %v1081
    %vm1083 = vcmask 458112
    %v1084 = vsel %vm1083, %v1082, %v1077
    %v1085 = vadd.s32 %v1038, 4294967240
    %v1086 = vlaneseq
    %v1087 = vshrl.u32 %v1086, 7
    %v1088 = vsub.s32 %v1085, %v1087
    %v1089 = vrot.slane %v1012, %v1088
    %vm1090 = vcmask 523712
    %v1091 = vsel %vm1090, %v1089, %v1084
    %v1092 = vadd.s32 %v1038, 4294967232
    %v1093 = vlaneseq
    %v1094 = vshrl.u32 %v1093, 7
    %v1095 = vsub.s32 %v1092, %v1094
    %v1096 = vrot.slane %v1013, %v1095
    %vm1097 = vcmask 589312
    %v1098 = vsel %vm1097, %v1096, %v1091
    %v1099 = vadd.s32 %v1038, 4294967224
    %v1100 = vlaneseq
    %v1101 = vshrl.u32 %v1100, 7
    %v1102 = vsub.s32 %v1099, %v1101
    %v1103 = vrot.slane %v1014, %v1102
    %vm1104 = vcmask 654912
    %v1105 = vsel %vm1104, %v1103, %v1098
    %v1106 = vadd.s32 %v1038, 4294967216
    %v1107 = vlaneseq
    %v1108 = vshrl.u32 %v1107, 7
    %v1109 = vsub.s32 %v1106, %v1108
    %v1110 = vrot.slane %v1015, %v1109
    %vm1111 = vcmask 720512
    %v1112 = vsel %vm1111, %v1110, %v1105
    %v1113 = vadd.s32 %v1038, 4294967208
    %v1114 = vlaneseq
    %v1115 = vshrl.u32 %v1114, 7
    %v1116 = vsub.s32 %v1113, %v1115
    %v1117 = vrot.slane %v1016, %v1116
    %vm1118 = vcmask 786112
    %v1119 = vsel %vm1118, %v1117, %v1112
    %v1120 = vadd.s32 %v1038, 4294967200
    %v1121 = vlaneseq
    %v1122 = vshrl.u32 %v1121, 7
    %v1123 = vsub.s32 %v1120, %v1122
    %v1124 = vrot.slane %v1017, %v1123
    %vm1125 = vcmask 851712
    %v1126 = vsel %vm1125, %v1124, %v1119
    %v1127 = vadd.s32 %v1038, 4294967192
    %v1128 = vlaneseq
    %v1129 = vshrl.u32 %v1128, 7
    %v1130 = vsub.s32 %v1127, %v1129
    %v1131 = vrot.slane %v1018, %v1130
    %vm1132 = vcmask 917312
    %v1133 = vsel %vm1132, %v1131, %v1126
    %v1134 = vadd.s32 %v1038, 4294967184
    %v1135 = vlaneseq
    %v1136 = vshrl.u32 %v1135, 7
    %v1137 = vsub.s32 %v1134, %v1136
    %v1138 = vrot.slane %v1019, %v1137
    %vm1139 = vcmask 982912
    %v1140 = vsel %vm1139, %v1138, %v1133
    %v1141 = vadd.s32 %v1038, 4294967176
    %v1142 = vlaneseq
    %v1143 = vshrl.u32 %v1142, 7
    %v1144 = vsub.s32 %v1141, %v1143
    %v1145 = vrot.slane %v1020, %v1144
    %vm1146 = vcmask 1048512
    %v1147 = vsel %vm1146, %v1145, %v1140
    %1149 = vst [vmem:[#allocation3] sm:$0x1] %v1147
    // Predicated region
    $region30: #{tpu_custom_call.1} parent=1 // pred_check
      _
    $region31: #{tpu_custom_call.1} parent=1 // pred_check_branch
      %1151 = sbr.rel (0) target = $region33
    $region32: #{tpu_custom_call.1} parent=1 // pred_region
      %s1153 = ssub.s32 16, 16
      %1154 = vsyncadd [#allocation4], %s1153
      %s1156 = sshll.u32 [#allocation3], 4
      %s1157 = int_to_ptr.vmem [resolvable:$true] %s1156
      %1159 = dma.vmem_to_hbm [thread:$0]  %s1157, 16, %s7, [#allocation4]
    $region33: #{tpu_custom_call.1} parent=1 // pred_fallthru
      _
    // Predicated region
    $region34: #{tpu_custom_call.1} parent=1 // pred_check
      _
    $region35: #{tpu_custom_call.1} parent=1 // pred_check_branch
      %1161 = sbr.rel (0) target = $region37
    $region36: #{tpu_custom_call.1} parent=1 // pred_region
      %1162 = dma.done [#allocation4], 16
    $region37: #{tpu_custom_call.1} parent=1 // pred_fallthru
      _
    %1163 = vsyncpa [#allocation4], 1

</llo_original>
